<compile_context>
chip_gen: v7x
topology: tpu7x:2x2x1
jax: 0.10.0
libtpu: 0.0.40
codegen_flags: <defaults>
</compile_context>

<pallas_src>
import jax
import jax.numpy as jnp
from jax import lax
from jax.experimental import pallas as pl
from jax.experimental.pallas import tpu as pltpu

# Small, MXU/lane-friendly sizes.
B = 4              # graphs per batch
N = 16             # nodes per graph
F_IN = 32          # input feature dim
NUM_HEADS = 2      # GAT heads
D_HEAD = 128       # per-head hidden dim (multiple of 128 -> lane-aligned slices)
D_OUT = NUM_HEADS * D_HEAD
A_PAD = 128        # lane-padded score-column count (only 2*H = 4 columns are used)
W_AUG_COLS = D_OUT + A_PAD

LEAKY_SLOPE = 0.2  # DGL GATConv default negative_slope
NEG_MASK = -1e30   # masked-softmax fill (matches reference -1e9 semantics)

# Cast MXU operands to bf16 (keep preferred_element_type=f32) on v6e/v7x at larger
# N/D; at this size f32 keeps the comparison tight and the v5e VPU path happy.
MXU_INPUT_DTYPE = jnp.float32


def gat_kernel(feats_ref, adj_ref, w_aug_ref, out_ref):
    feats = feats_ref[...]                                   # [GN, F_IN]
    adj = adj_ref[...]                                       # [GN, GN] block-diagonal

    # One MXU matmul produces projected features AND attention scores:
    #   h_aug[:, :D_OUT]      = feats @ W
    #   h_aug[:, D_OUT+2h]    = a_src[h] . h_i   (head h)
    #   h_aug[:, D_OUT+2h+1]  = a_dst[h] . h_i
    h_aug = jnp.dot(feats.astype(MXU_INPUT_DTYPE),
                    w_aug_ref[...].astype(MXU_INPUT_DTYPE),
                    preferred_element_type=jnp.float32)      # [GN, D_OUT + A_PAD]
    h = h_aug[:, :D_OUT]                                     # [GN, D_OUT]
    scores = h_aug[:, D_OUT:]                                # [GN, A_PAD]
    scores_t = scores.T                                      # [A_PAD, GN] one XLU transpose

    emb_heads = []
    ssq = None
    for hd in range(NUM_HEADS):                              # static unroll, H = 2
        s_src = scores[:, 2 * hd:2 * hd + 1]                 # [GN, 1]
        s_dst = scores_t[2 * hd + 1:2 * hd + 2, :]           # [1, GN]
        e = s_src + s_dst                                    # [GN, GN] broadcast add
        e = jnp.where(e > 0, e, LEAKY_SLOPE * e)             # LeakyReLU (VPU)
        e = jnp.where(adj > 0, e, NEG_MASK)                  # masked logits (kills cross-graph)

        # Masked softmax over neighbors j. Row max is attained at an edge (self-loop
        # guaranteed), so denom >= 1: no clamp needed, non-edges are exactly 0.
        m = jnp.max(e, axis=1, keepdims=True)                # [GN, 1]
        p = jnp.exp(e - m)                                   # edges <= 1, non-edges -> 0
        denom = jnp.sum(p, axis=1, keepdims=True)
        alpha = p * pl.reciprocal(denom, approx=True)        # EUP reciprocal

        # Block-diagonal alpha -> one batched aggregation matmul per head (MXU).
        h_h = h[:, hd * D_HEAD:(hd + 1) * D_HEAD]            # [GN, D]
        agg = jnp.dot(alpha.astype(MXU_INPUT_DTYPE),
                      h_h.astype(MXU_INPUT_DTYPE),
                      preferred_element_type=jnp.float32)    # [GN, D]

        # ELU (clamped negative branch: no overflow in the unselected lane).
        agg = jnp.where(agg > 0.0, agg, jnp.exp(jnp.minimum(agg, 0.0)) - 1.0)
        emb_heads.append(agg)
        part = jnp.sum(agg * agg, axis=1, keepdims=True)
        ssq = part if ssq is None else ssq + part

    # F.normalize(emb, dim=1): x * rsqrt(max(sum x^2, eps^2)); write each head's
    # slice directly (128-lane aligned -> unmasked stores, no lane concat).
    inv_norm = lax.rsqrt(jnp.maximum(ssq, 1e-24))            # EUP rsqrt
    for hd in range(NUM_HEADS):
        out_ref[:, hd * D_HEAD:(hd + 1) * D_HEAD] = emb_heads[hd] * inv_norm


def pack_w_aug(w, a_src, a_dst):
    """Fold the attention vectors into the projection: W_aug = [W | W @ a_blk]."""
    a_blk = jnp.zeros((D_OUT, A_PAD), jnp.float32)
    for hd in range(NUM_HEADS):
        a_blk = a_blk.at[hd * D_HEAD:(hd + 1) * D_HEAD, 2 * hd].set(a_src[hd])
        a_blk = a_blk.at[hd * D_HEAD:(hd + 1) * D_HEAD, 2 * hd + 1].set(a_dst[hd])
    return jnp.concatenate([w, w @ a_blk], axis=1)           # [F_IN, D_OUT + A_PAD]


def _graphs_per_block(batch):
    """v7x has 2 TensorCores: use 2 grid steps. v5e/v6e (1 TC): whole batch in one step."""
    kind = jax.devices()[0].device_kind.lower()
    if ("v7" in kind or "7x" in kind) and batch % 2 == 0 and batch >= 2:
        return batch // 2
    return batch


def _pack_block_diag_adj(adj, graphs_per_block):
    """[B,N,N] -> [num_blocks, G*N, G*N] block-diagonal adjacency per grid block."""
    b, n, _ = adj.shape
    g = graphs_per_block
    nb = b // g
    eye = jnp.eye(g, dtype=adj.dtype)
    adj_r = adj.reshape(nb, g, n, n)
    return jnp.einsum("kgij,gc->kgicj", adj_r, eye).reshape(nb, g * n, g * n)


def gnn_model(feats, adj, w_aug, graphs_per_block=None):
    b, n, f_in = feats.shape
    g = graphs_per_block if graphs_per_block is not None else _graphs_per_block(b)
    assert b % g == 0
    nb = b // g
    gn = g * n

    # TODO(synk): dgl.graph sparse message passing / graph batching is represented
    # here as a dense block-diagonal adjacency mask per grid block.
    feats_flat = feats.reshape(b * n, f_in)                  # node-major, no in-kernel reshape
    adj_bd = _pack_block_diag_adj(adj, g)                    # [nb, gn, gn]

    out_flat = pl.pallas_call(
        gat_kernel,
        out_shape=jax.ShapeDtypeStruct((b * n, D_OUT), jnp.float32),
        grid=(nb,),
        in_specs=[
            pl.BlockSpec((gn, f_in), lambda i: (i, 0)),
            pl.BlockSpec((None, gn, gn), lambda i: (i, 0, 0)),
            pl.BlockSpec((f_in, W_AUG_COLS), lambda i: (0, 0)),
        ],
        out_specs=pl.BlockSpec((gn, D_OUT), lambda i: (i, 0)),
        compiler_params=pltpu.CompilerParams(
            dimension_semantics=("parallel",)),               # v7x: one step per TC
    )(feats_flat, adj_bd, w_aug)
    return out_flat.reshape(b, n, D_OUT)


def gnn_model_ref(feats, adj, w, a_src, a_dst):
    """Pure-JAX reference (standard masked-softmax GAT + ELU + L2 normalize)."""
    def one_graph(fe, ad):
        h = fe @ w
        outs = []
        for hd in range(NUM_HEADS):
            hh = h[:, hd * D_HEAD:(hd + 1) * D_HEAD]
            s_src = (hh * a_src[hd]).sum(axis=1, keepdims=True)
            s_dst = (hh * a_dst[hd]).sum(axis=1, keepdims=True)
            e = s_src + s_dst.T
            e = jnp.where(e > 0, e, LEAKY_SLOPE * e)
            e = jnp.where(ad > 0, e, -1e9)
            alpha = jax.nn.softmax(e, axis=1)
            outs.append(alpha @ hh)
        emb = jnp.concatenate(outs, axis=1)
        emb = jnp.where(emb > 0.0, emb, jnp.exp(jnp.minimum(emb, 0.0)) - 1.0)
        norm = jnp.maximum(jnp.sqrt((emb * emb).sum(axis=1, keepdims=True)), 1e-12)
        return emb / norm
    return jax.vmap(one_graph)(feats, adj)


if __name__ == "__main__":
    key = jax.random.PRNGKey(0)
    k_feat, k_adj, k_w, k_as, k_ad = jax.random.split(key, 5)

    feats = jax.random.normal(k_feat, (B, N, F_IN), dtype=jnp.float32)

    # Random sparse-ish adjacency as a dense mask + self-loops.
    adj = (jax.random.uniform(k_adj, (B, N, N)) < 0.3).astype(jnp.float32)
    adj = jnp.maximum(adj, jnp.eye(N, dtype=jnp.float32)[None, :, :])

    # Deterministic parameter init (glorot-ish scale).
    w = jax.random.normal(k_w, (F_IN, D_OUT), dtype=jnp.float32) * 0.1
    a_src = jax.random.normal(k_as, (NUM_HEADS, D_HEAD), dtype=jnp.float32) * 0.1
    a_dst = jax.random.normal(k_ad, (NUM_HEADS, D_HEAD), dtype=jnp.float32) * 0.1

    w_aug = pack_w_aug(w, a_src, a_dst)

    out = gnn_model(feats, adj, w_aug)
    out = jax.block_until_ready(out)

    ref = gnn_model_ref(feats, adj, w, a_src, a_dst)
    # 1e-3 tolerance: kernel uses the approximate EUP reciprocal for the softmax
    # denominator (~1e-4 rel error worst case); outputs are unit-normalized rows.
    if not jnp.allclose(out, ref, atol=1e-3, rtol=1e-3):
        diff = jnp.max(jnp.abs(out - ref))
        raise AssertionError(f"Pallas output does not match reference, max|diff|={diff}")

    print("KERNEL_OK")
</pallas_src>

<mosaic_0001>
module attributes {stable_mosaic.version = 11 : i64} {
  func.func @gat_kernel(%arg0: i32, %arg1: memref<64x32xf32, #tpu.memory_space<vmem>>, %arg2: memref<1x64x64xf32, #tpu.memory_space<vmem>>, %arg3: memref<32x384xf32, #tpu.memory_space<vmem>>, %arg4: memref<64x256xf32, #tpu.memory_space<vmem>>) attributes {dimension_semantics = [#tpu.dimension_semantics<parallel>], iteration_bounds = array<i64: 1>, scalar_prefetch = 0 : i64, scratch_operands = 0 : i64, tpu.core_type = #tpu.core_type<tc>, window_params = [{transform_indices = @transform_0, window_bounds = array<i64: 64, 32>}, {transform_indices = @transform_1, window_bounds = array<i64: 1, 64, 64>}, {pipeline_mode = #tpu.pipeline_mode<synchronous>, transform_indices = @transform_2, window_bounds = array<i64: 32, 384>}, {transform_indices = @transform_3, window_bounds = array<i64: 64, 256>}]} {
    %c0 = arith.constant 0 : index
    %c0_0 = arith.constant 0 : index
    %0 = vector.load %arg1[%c0, %c0_0] : memref<64x32xf32, #tpu.memory_space<vmem>>, vector<64x32xf32>
    %c0_1 = arith.constant 0 : index
    %c0_2 = arith.constant 0 : index
    %c0_3 = arith.constant 0 : index
    %1 = vector.load %arg2[%c0_1, %c0_2, %c0_3] : memref<1x64x64xf32, #tpu.memory_space<vmem>>, vector<1x64x64xf32>
    %2 = vector.shape_cast %1 : vector<1x64x64xf32> to vector<64x64xf32>
    %c0_4 = arith.constant 0 : index
    %c0_5 = arith.constant 0 : index
    %3 = vector.load %arg3[%c0_4, %c0_5] : memref<32x384xf32, #tpu.memory_space<vmem>>, vector<32x384xf32>
    %cst = arith.constant dense<0.000000e+00> : vector<64x384xf32>
    %4 = tpu.matmul %0, %3, %cst {dimension_numbers = #tpu.dot_dimension_numbers<[1], [0], [0], [1], [0, 0, 1, 1], [], []>} : vector<64x32xf32>, vector<32x384xf32>, vector<64x384xf32> -> vector<64x384xf32>
    %5 = vector.extract_strided_slice %4 {offsets = [0, 0], sizes = [64, 256], strides = [1, 1]} : vector<64x384xf32> to vector<64x256xf32>
    %6 = vector.extract_strided_slice %4 {offsets = [0, 256], sizes = [64, 128], strides = [1, 1]} : vector<64x384xf32> to vector<64x128xf32>
    %7 = tpu.transpose %6, [1, 0] : vector<64x128xf32> -> vector<128x64xf32>
    %8 = vector.extract_strided_slice %6 {offsets = [0, 0], sizes = [64, 1], strides = [1, 1]} : vector<64x128xf32> to vector<64x1xf32>
    %9 = vector.extract_strided_slice %7 {offsets = [1, 0], sizes = [1, 64], strides = [1, 1]} : vector<128x64xf32> to vector<1x64xf32>
    %10 = vector.broadcast %8 : vector<64x1xf32> to vector<64x64xf32>
    %11 = vector.broadcast %9 : vector<1x64xf32> to vector<64x64xf32>
    %12 = arith.addf %10, %11 : vector<64x64xf32>
    %cst_6 = arith.constant 0.000000e+00 : f32
    %13 = vector.broadcast %cst_6 : f32 to vector<64x64xf32>
    %14 = arith.cmpf ogt, %12, %13 : vector<64x64xf32>
    %cst_7 = arith.constant 2.000000e-01 : f32
    %15 = vector.broadcast %cst_7 : f32 to vector<64x64xf32>
    %16 = arith.mulf %15, %12 : vector<64x64xf32>
    %17 = arith.select %14, %12, %16 : vector<64x64xi1>, vector<64x64xf32>
    %cst_8 = arith.constant 0.000000e+00 : f32
    %18 = vector.broadcast %cst_8 : f32 to vector<64x64xf32>
    %19 = arith.cmpf ogt, %2, %18 : vector<64x64xf32>
    %cst_9 = arith.constant -1.000000e+30 : f32
    %20 = vector.broadcast %cst_9 : f32 to vector<64x64xf32>
    %21 = arith.select %19, %17, %20 : vector<64x64xi1>, vector<64x64xf32>
    %cst_10 = arith.constant dense<0xFF800000> : vector<64xf32>
    %22 = vector.multi_reduction <maximumf>, %21, %cst_10 [1] : vector<64x64xf32> to vector<64xf32>
    %23 = vector.shape_cast %22 : vector<64xf32> to vector<64x1xf32>
    %24 = vector.broadcast %23 : vector<64x1xf32> to vector<64x64xf32>
    %25 = arith.subf %21, %24 : vector<64x64xf32>
    %26 = math.exp %25 : vector<64x64xf32>
    %cst_11 = arith.constant dense<0.000000e+00> : vector<64xf32>
    %27 = vector.multi_reduction <add>, %26, %cst_11 [1] : vector<64x64xf32> to vector<64xf32>
    %28 = vector.shape_cast %27 : vector<64xf32> to vector<64x1xf32>
    %29 = tpu.reciprocal %28 {approx = true} : vector<64x1xf32> -> vector<64x1xf32>
    %30 = vector.broadcast %29 : vector<64x1xf32> to vector<64x64xf32>
    %31 = arith.mulf %26, %30 : vector<64x64xf32>
    %32 = vector.extract_strided_slice %5 {offsets = [0, 0], sizes = [64, 128], strides = [1, 1]} : vector<64x256xf32> to vector<64x128xf32>
    %cst_12 = arith.constant dense<0.000000e+00> : vector<64x128xf32>
    %33 = tpu.matmul %31, %32, %cst_12 {dimension_numbers = #tpu.dot_dimension_numbers<[1], [0], [0], [1], [0, 0, 1, 1], [], []>} : vector<64x64xf32>, vector<64x128xf32>, vector<64x128xf32> -> vector<64x128xf32>
    %cst_13 = arith.constant 0.000000e+00 : f32
    %34 = vector.broadcast %cst_13 : f32 to vector<64x128xf32>
    %35 = arith.cmpf ogt, %33, %34 : vector<64x128xf32>
    %cst_14 = arith.constant 0.000000e+00 : f32
    %36 = vector.broadcast %cst_14 : f32 to vector<64x128xf32>
    %37 = arith.minimumf %33, %36 : vector<64x128xf32>
    %38 = math.exp %37 : vector<64x128xf32>
    %cst_15 = arith.constant 1.000000e+00 : f32
    %39 = vector.broadcast %cst_15 : f32 to vector<64x128xf32>
    %40 = arith.subf %38, %39 : vector<64x128xf32>
    %41 = arith.select %35, %33, %40 : vector<64x128xi1>, vector<64x128xf32>
    %42 = arith.mulf %41, %41 : vector<64x128xf32>
    %cst_16 = arith.constant dense<0.000000e+00> : vector<64xf32>
    %43 = vector.multi_reduction <add>, %42, %cst_16 [1] : vector<64x128xf32> to vector<64xf32>
    %44 = vector.shape_cast %43 : vector<64xf32> to vector<64x1xf32>
    %45 = vector.extract_strided_slice %6 {offsets = [0, 2], sizes = [64, 1], strides = [1, 1]} : vector<64x128xf32> to vector<64x1xf32>
    %46 = vector.extract_strided_slice %7 {offsets = [3, 0], sizes = [1, 64], strides = [1, 1]} : vector<128x64xf32> to vector<1x64xf32>
    %47 = vector.broadcast %45 : vector<64x1xf32> to vector<64x64xf32>
    %48 = vector.broadcast %46 : vector<1x64xf32> to vector<64x64xf32>
    %49 = arith.addf %47, %48 : vector<64x64xf32>
    %cst_17 = arith.constant 0.000000e+00 : f32
    %50 = vector.broadcast %cst_17 : f32 to vector<64x64xf32>
    %51 = arith.cmpf ogt, %49, %50 : vector<64x64xf32>
    %cst_18 = arith.constant 2.000000e-01 : f32
    %52 = vector.broadcast %cst_18 : f32 to vector<64x64xf32>
    %53 = arith.mulf %52, %49 : vector<64x64xf32>
    %54 = arith.select %51, %49, %53 : vector<64x64xi1>, vector<64x64xf32>
    %cst_19 = arith.constant 0.000000e+00 : f32
    %55 = vector.broadcast %cst_19 : f32 to vector<64x64xf32>
    %56 = arith.cmpf ogt, %2, %55 : vector<64x64xf32>
    %cst_20 = arith.constant -1.000000e+30 : f32
    %57 = vector.broadcast %cst_20 : f32 to vector<64x64xf32>
    %58 = arith.select %56, %54, %57 : vector<64x64xi1>, vector<64x64xf32>
    %cst_21 = arith.constant dense<0xFF800000> : vector<64xf32>
    %59 = vector.multi_reduction <maximumf>, %58, %cst_21 [1] : vector<64x64xf32> to vector<64xf32>
    %60 = vector.shape_cast %59 : vector<64xf32> to vector<64x1xf32>
    %61 = vector.broadcast %60 : vector<64x1xf32> to vector<64x64xf32>
    %62 = arith.subf %58, %61 : vector<64x64xf32>
    %63 = math.exp %62 : vector<64x64xf32>
    %cst_22 = arith.constant dense<0.000000e+00> : vector<64xf32>
    %64 = vector.multi_reduction <add>, %63, %cst_22 [1] : vector<64x64xf32> to vector<64xf32>
    %65 = vector.shape_cast %64 : vector<64xf32> to vector<64x1xf32>
    %66 = tpu.reciprocal %65 {approx = true} : vector<64x1xf32> -> vector<64x1xf32>
    %67 = vector.broadcast %66 : vector<64x1xf32> to vector<64x64xf32>
    %68 = arith.mulf %63, %67 : vector<64x64xf32>
    %69 = vector.extract_strided_slice %5 {offsets = [0, 128], sizes = [64, 128], strides = [1, 1]} : vector<64x256xf32> to vector<64x128xf32>
    %cst_23 = arith.constant dense<0.000000e+00> : vector<64x128xf32>
    %70 = tpu.matmul %68, %69, %cst_23 {dimension_numbers = #tpu.dot_dimension_numbers<[1], [0], [0], [1], [0, 0, 1, 1], [], []>} : vector<64x64xf32>, vector<64x128xf32>, vector<64x128xf32> -> vector<64x128xf32>
    %cst_24 = arith.constant 0.000000e+00 : f32
    %71 = vector.broadcast %cst_24 : f32 to vector<64x128xf32>
    %72 = arith.cmpf ogt, %70, %71 : vector<64x128xf32>
    %cst_25 = arith.constant 0.000000e+00 : f32
    %73 = vector.broadcast %cst_25 : f32 to vector<64x128xf32>
    %74 = arith.minimumf %70, %73 : vector<64x128xf32>
    %75 = math.exp %74 : vector<64x128xf32>
    %cst_26 = arith.constant 1.000000e+00 : f32
    %76 = vector.broadcast %cst_26 : f32 to vector<64x128xf32>
    %77 = arith.subf %75, %76 : vector<64x128xf32>
    %78 = arith.select %72, %70, %77 : vector<64x128xi1>, vector<64x128xf32>
    %79 = arith.mulf %78, %78 : vector<64x128xf32>
    %cst_27 = arith.constant dense<0.000000e+00> : vector<64xf32>
    %80 = vector.multi_reduction <add>, %79, %cst_27 [1] : vector<64x128xf32> to vector<64xf32>
    %81 = vector.shape_cast %80 : vector<64xf32> to vector<64x1xf32>
    %82 = arith.addf %44, %81 : vector<64x1xf32>
    %cst_28 = arith.constant 1.000000e-24 : f32
    %83 = vector.broadcast %cst_28 : f32 to vector<64x1xf32>
    %84 = arith.maximumf %82, %83 : vector<64x1xf32>
    %85 = math.rsqrt %84 : vector<64x1xf32>
    %86 = vector.broadcast %85 : vector<64x1xf32> to vector<64x128xf32>
    %87 = arith.mulf %41, %86 : vector<64x128xf32>
    %c0_29 = arith.constant 0 : index
    %c0_30 = arith.constant 0 : index
    %88 = vector.load %arg4[%c0_29, %c0_30] : memref<64x256xf32, #tpu.memory_space<vmem>>, vector<64x128xf32>
    tpu.vector_store %arg4[%c0_29, %c0_30], %87 {strides = array<i32>} : memref<64x256xf32, #tpu.memory_space<vmem>>, vector<64x128xf32>,
    %89 = vector.broadcast %85 : vector<64x1xf32> to vector<64x128xf32>
    %90 = arith.mulf %78, %89 : vector<64x128xf32>
    %c0_31 = arith.constant 0 : index
    %c128 = arith.constant 128 : index
    %91 = vector.load %arg4[%c0_31, %c128] : memref<64x256xf32, #tpu.memory_space<vmem>>, vector<64x128xf32>
    tpu.vector_store %arg4[%c0_31, %c128], %90 {strides = array<i32>} : memref<64x256xf32, #tpu.memory_space<vmem>>, vector<64x128xf32>,
    return
  }
  func.func @transform_0(%arg0: i32) -> (i32, i32) {
    %c0_i32 = arith.constant 0 : i32
    %c0_i32_0 = arith.constant 0 : i32
    return %arg0, %c0_i32 : i32, i32
  }
  func.func @transform_1(%arg0: i32) -> (i32, i32, i32) {
    %c0_i32 = arith.constant 0 : i32
    %c0_i32_0 = arith.constant 0 : i32
    %c0_i32_1 = arith.constant 0 : i32
    return %arg0, %c0_i32, %c0_i32_0 : i32, i32, i32
  }
  func.func @transform_2(%arg0: i32) -> (i32, i32) {
    %c0_i32 = arith.constant 0 : i32
    %c0_i32_0 = arith.constant 0 : i32
    %c0_i32_1 = arith.constant 0 : i32
    return %c0_i32, %c0_i32_0 : i32, i32
  }
  func.func @transform_3(%arg0: i32) -> (i32, i32) {
    %c0_i32 = arith.constant 0 : i32
    %c0_i32_0 = arith.constant 0 : i32
    return %arg0, %c0_i32 : i32, i32
  }
}

</mosaic_0001>

<llo_original>
// kernel: tpu_custom_call.1
$region0: #{tpu_custom_call.1}
  #allocation0 [shape = 'u32[]', space=smem, size = 0x4, offset = 0x4, fixed_abs, tag = 'smem constant byte address 0x4 - core index']
  #allocation1 [shape = 'u32[144,128]{1,0:T(1,128)}', space=vmem, size = 0x12000, scoped, tag = 'internal scratch']
  %s0 = inlined_call_operand.vmem [shape: f32[64,32], index: 0, kind: input, shape index: {}]
  %s1 = inlined_call_operand.hbm [shape: f32[1,64,64], index: 1, kind: input, shape index: {}]
  %s2 = inlined_call_operand.vmem [shape: f32[32,384], index: 2, kind: input, shape index: {}]
  %s3 = inlined_call_operand.hbm [shape: f32[64,256], index: 3, kind: output, shape index: {}]
  %s4 = sld [smem:[#allocation0]]
  $region26: #{tpu_custom_call.1} parent=0
    _
  %s6 = ssub.s32 1, %s4
  %s7 = scalar_select 0, %s6, %s4
  $region1: #{tpu_custom_call.1} parent=0
    #allocation2 [shape = 'u8[32768]{0}', space=vmem, size = 0x8000, scoped, tag = 'input window, operand 1, single buffered']
    #allocation3 [shape = 's32[1]{0}', space=sflag, size = 0x4, scoped, tag = 'scoped memory for tpu_custom_call.1']
    #allocation4 [shape = 's32[1]{0}', space=sflag, size = 0x4, scoped, tag = 'scoped memory for tpu_custom_call.1']
    #allocation5 [shape = 'u8[65536]{0}', space=vmem, size = 0x10000, scoped, tag = 'output window, operand 0, single buffered']
    %8 = vsyncpa [#allocation3], 0
    %9 = vsyncpa [#allocation4], 0
    // Predicated region
    $region2: #{tpu_custom_call.1} parent=1 // pred_check
      _
    $region3: #{tpu_custom_call.1} parent=1 // pred_check_branch
      %11 = sbr.rel (0) target = $region5
    $region4: #{tpu_custom_call.1} parent=1 // pred_region
      _
    $region5: #{tpu_custom_call.1} parent=1 // pred_fallthru
      _
    // Predicated region
    $region6: #{tpu_custom_call.1} parent=1 // pred_check
      _
    $region7: #{tpu_custom_call.1} parent=1 // pred_check_branch
      %13 = sbr.rel (0) target = $region9
    $region8: #{tpu_custom_call.1} parent=1 // pred_region
      %s15 = ssub.s32 1024, 1024
      %16 = vsyncadd [#allocation3], %s15
      %s17 = sshll.u32 [#allocation2], 4
      %s18 = int_to_ptr.vmem [resolvable:$true] %s17
      %23 = dma.hbm_to_vmem [thread:$0]  %s1, 1024, %s18, [#allocation3], 128, 128, 8
    $region9: #{tpu_custom_call.1} parent=1 // pred_fallthru
      _
    // Predicated region
    $region10: #{tpu_custom_call.1} parent=1 // pred_check
      _
    $region11: #{tpu_custom_call.1} parent=1 // pred_check_branch
      %25 = sbr.rel (0) target = $region13
    $region12: #{tpu_custom_call.1} parent=1 // pred_region
      _
    $region13: #{tpu_custom_call.1} parent=1 // pred_fallthru
      _
    // Predicated region
    $region14: #{tpu_custom_call.1} parent=1 // pred_check
      _
    $region15: #{tpu_custom_call.1} parent=1 // pred_check_branch
      %27 = sbr.rel (0) target = $region17
    $region16: #{tpu_custom_call.1} parent=1 // pred_region
      %28 = dma.done [#allocation3], 1024
    $region17: #{tpu_custom_call.1} parent=1 // pred_fallthru
      _
    %v29 = vld [vmem:[%s0] sm:$0xff]
    %v30 = vld [vmem:[%s0 + $0x8] sm:$0xff]
    %v31 = vld [vmem:[%s0 + $0x10] sm:$0xff]
    %v32 = vld [vmem:[%s0 + $0x18] sm:$0xff]
    %v33 = vld [vmem:[%s0 + $0x20] sm:$0xff]
    %v34 = vld [vmem:[%s0 + $0x28] sm:$0xff]
    %v35 = vld [vmem:[%s0 + $0x30] sm:$0xff]
    %v36 = vld [vmem:[%s0 + $0x38] sm:$0xff]
    %v37 = vld [vmem:[#allocation2] sm:$0xff]
    %v38 = vld [vmem:[#allocation2 + $0x8] sm:$0xff]
    %v39 = vld [vmem:[#allocation2 + $0x10] sm:$0xff]
    %v40 = vld [vmem:[#allocation2 + $0x18] sm:$0xff]
    %v41 = vld [vmem:[#allocation2 + $0x20] sm:$0xff]
    %v42 = vld [vmem:[#allocation2 + $0x28] sm:$0xff]
    %v43 = vld [vmem:[#allocation2 + $0x30] sm:$0xff]
    %v44 = vld [vmem:[#allocation2 + $0x38] sm:$0xff]
    %v45 = vld [vmem:[%s2] sm:$0xff]
    %v46 = vld [vmem:[%s2 + $0x8] sm:$0xff]
    %v47 = vld [vmem:[%s2 + $0x10] sm:$0xff]
    %v48 = vld [vmem:[%s2 + $0x18] sm:$0xff]
    %v49 = vld [vmem:[%s2 + $0x20] sm:$0xff]
    %v50 = vld [vmem:[%s2 + $0x28] sm:$0xff]
    %v51 = vld [vmem:[%s2 + $0x30] sm:$0xff]
    %v52 = vld [vmem:[%s2 + $0x38] sm:$0xff]
    %v53 = vld [vmem:[%s2 + $0x40] sm:$0xff]
    %v54 = vld [vmem:[%s2 + $0x48] sm:$0xff]
    %v55 = vld [vmem:[%s2 + $0x50] sm:$0xff]
    %v56 = vld [vmem:[%s2 + $0x58] sm:$0xff]
    %vm57 = vcmask 261120
    %v59 = vsel %vm57, %v29, 0
    %v62 = vsel %vm57, %v30, 0
    %v65 = vsel %vm57, %v31, 0
    %v68 = vsel %vm57, %v32, 0
    %v71 = vsel %vm57, %v33, 0
    %v74 = vsel %vm57, %v34, 0
    %v77 = vsel %vm57, %v35, 0
    %v80 = vsel %vm57, %v36, 0
    %82 = vmatprep.subr.mxu0 %v46
    %83 = vmatpush1.msra.mxu0 %v45
    %84 = vmatprep.subr.mxu0 %v49
    %85 = vmatpush1.msra.mxu0 %v48
    %86 = vmatprep.subr.mxu0 %v52
    %87 = vmatpush1.msra.mxu0 %v51
    %88 = vmatprep.subr.mxu0 %v55
    %89 = vmatpush1.msra.mxu0 %v54
    %90 = vmatprep.subr.mxu0 0.0
    %91 = vmatpush1.msra.mxu0 0.0
    %92 = vmatprep.subr.mxu0 0.0
    %93 = vmatpush1.msra.mxu0 0.0
    %94 = vmatprep.subr.mxu0 0.0
    %95 = vmatpush1.msra.mxu0 0.0
    %96 = vmatprep.subr.mxu0 0.0
    %97 = vmatpush1.msra.mxu0 0.0
    %98 = vmatprep.subr.mxu0 0.0
    %99 = vmatpush1.msra.mxu0 0.0
    %100 = vmatprep.subr.mxu0 0.0
    %101 = vmatpush1.msra.mxu0 0.0
    %102 = vmatprep.subr.mxu0 0.0
    %103 = vmatpush1.msra.mxu0 0.0
    %104 = vmatprep.subr.mxu0 0.0
    %105 = vmatpush1.msra.mxu0 0.0
    %106 = vmatprep.subr.mxu0 0.0
    %107 = vmatpush1.msra.mxu0 0.0
    %108 = vmatprep.subr.mxu0 0.0
    %109 = vmatpush1.msra.mxu0 0.0
    %110 = vmatprep.subr.mxu0 0.0
    %111 = vmatpush1.msra.mxu0 0.0
    %112 = vmatprep.subr.mxu0 0.0
    %113 = vmatpush1.msra.mxu0 0.0
    %114 = vmatprep.subr.mxu0 0.0
    %115 = vmatpush1.msra.mxu0 0.0
    %116 = vmatprep.subr.mxu0 0.0
    %117 = vmatpush1.msra.mxu0 0.0
    %118 = vmatprep.subr.mxu0 0.0
    %119 = vmatpush1.msra.mxu0 0.0
    %120 = vmatprep.subr.mxu0 0.0
    %121 = vmatpush1.msra.mxu0 0.0
    %122 = vmatprep.subr.mxu0 0.0
    %123 = vmatpush1.msra.mxu0 0.0
    %124 = vmatprep.subr.mxu0 0.0
    %125 = vmatpush1.msra.mxu0 0.0
    %126 = vmatprep.subr.mxu0 0.0
    %127 = vmatpush1.msra.mxu0 0.0
    %128 = vmatprep.subr.mxu0 0.0
    %129 = vmatpush1.msra.mxu0 0.0
    %130 = vmatprep.subr.mxu0 0.0
    %131 = vmatpush1.msra.mxu0 0.0
    %132 = vmatprep.subr.mxu0 0.0
    %133 = vmatpush1.msra.mxu0 0.0
    %134 = vmatprep.subr.mxu0 0.0
    %135 = vmatpush1.msra.mxu0 0.0
    %136 = vmatprep.subr.mxu0 0.0
    %137 = vmatpush1.msra.mxu0 0.0
    %138 = vmatprep.subr.mxu0 0.0
    %139 = vmatpush1.msra.mxu0 0.0
    %140 = vmatprep.subr.mxu0 0.0
    %141 = vmatpush1.msra.mxu0 0.0
    %142 = vmatprep.subr.mxu0 0.0
    %143 = vmatpush1.msra.mxu0 0.0
    %144 = vmatprep.subr.mxu0 0.0
    %145 = vmatpush1.msra.mxu0 0.0
    %146 = vmatprep.mubr.f32.mxu0 0.0
    %147 = vmatmul.mubr.f32.gmra.mrb[0].mxu0 %v59
    %v148 = vpop.f32.mrb[0].mxu0
    %v149 = vadd.f32 0.0, %v148
    %v150 = vpop.f32.mrb[0].mxu0
    %v151 = vadd.f32 0.0, %v150
    %152 = vmatprep.mubr.f32.mxu0 0.0
    %153 = vmatmul.mubr.f32.gmra.mrb[0].mxu0 %v62
    %v154 = vpop.f32.mrb[0].mxu0
    %v155 = vadd.f32 0.0, %v154
    %v156 = vpop.f32.mrb[0].mxu0
    %v157 = vadd.f32 0.0, %v156
    %158 = vmatprep.mubr.f32.mxu0 0.0
    %159 = vmatmul.mubr.f32.gmra.mrb[0].mxu0 %v65
    %v160 = vpop.f32.mrb[0].mxu0
    %v161 = vadd.f32 0.0, %v160
    %v162 = vpop.f32.mrb[0].mxu0
    %v163 = vadd.f32 0.0, %v162
    %164 = vmatprep.mubr.f32.mxu0 0.0
    %165 = vmatmul.mubr.f32.gmra.mrb[0].mxu0 %v68
    %v166 = vpop.f32.mrb[0].mxu0
    %v167 = vadd.f32 0.0, %v166
    %v168 = vpop.f32.mrb[0].mxu0
    %v169 = vadd.f32 0.0, %v168
    %170 = vmatprep.mubr.f32.mxu0 0.0
    %171 = vmatmul.mubr.f32.gmra.mrb[0].mxu0 %v71
    %v172 = vpop.f32.mrb[0].mxu0
    %v173 = vadd.f32 0.0, %v172
    %v174 = vpop.f32.mrb[0].mxu0
    %v175 = vadd.f32 0.0, %v174
    %176 = vmatprep.mubr.f32.mxu0 0.0
    %177 = vmatmul.mubr.f32.gmra.mrb[0].mxu0 %v74
    %v178 = vpop.f32.mrb[0].mxu0
    %v179 = vadd.f32 0.0, %v178
    %v180 = vpop.f32.mrb[0].mxu0
    %v181 = vadd.f32 0.0, %v180
    %182 = vmatprep.mubr.f32.mxu0 0.0
    %183 = vmatmul.mubr.f32.gmra.mrb[0].mxu0 %v77
    %v184 = vpop.f32.mrb[0].mxu0
    %v185 = vadd.f32 0.0, %v184
    %v186 = vpop.f32.mrb[0].mxu0
    %v187 = vadd.f32 0.0, %v186
    %188 = vmatprep.mubr.f32.mxu0 0.0
    %189 = vmatmul.mubr.f32.gmra.mrb[0].mxu0 %v80
    %v190 = vpop.f32.mrb[0].mxu0
    %v191 = vadd.f32 0.0, %v190
    %v192 = vpop.f32.mrb[0].mxu0
    %v193 = vadd.f32 0.0, %v192
    %194 = vdwg.mxu0
    %195 = vmatprep.subr.mxu0 0.0
    %196 = vmatpush1.msra.mxu0 %v47
    %197 = vmatprep.subr.mxu0 0.0
    %198 = vmatpush1.msra.mxu0 %v50
    %199 = vmatprep.subr.mxu0 0.0
    %200 = vmatpush1.msra.mxu0 %v53
    %201 = vmatprep.subr.mxu0 0.0
    %202 = vmatpush1.msra.mxu0 %v56
    %203 = vmatprep.subr.mxu0 0.0
    %204 = vmatpush1.msra.mxu0 0.0
    %205 = vmatprep.subr.mxu0 0.0
    %206 = vmatpush1.msra.mxu0 0.0
    %207 = vmatprep.subr.mxu0 0.0
    %208 = vmatpush1.msra.mxu0 0.0
    %209 = vmatprep.subr.mxu0 0.0
    %210 = vmatpush1.msra.mxu0 0.0
    %211 = vmatprep.subr.mxu0 0.0
    %212 = vmatpush1.msra.mxu0 0.0
    %213 = vmatprep.subr.mxu0 0.0
    %214 = vmatpush1.msra.mxu0 0.0
    %215 = vmatprep.subr.mxu0 0.0
    %216 = vmatpush1.msra.mxu0 0.0
    %217 = vmatprep.subr.mxu0 0.0
    %218 = vmatpush1.msra.mxu0 0.0
    %219 = vmatprep.subr.mxu0 0.0
    %220 = vmatpush1.msra.mxu0 0.0
    %221 = vmatprep.subr.mxu0 0.0
    %222 = vmatpush1.msra.mxu0 0.0
    %223 = vmatprep.subr.mxu0 0.0
    %224 = vmatpush1.msra.mxu0 0.0
    %225 = vmatprep.subr.mxu0 0.0
    %226 = vmatpush1.msra.mxu0 0.0
    %227 = vmatprep.subr.mxu0 0.0
    %228 = vmatpush1.msra.mxu0 0.0
    %229 = vmatprep.subr.mxu0 0.0
    %230 = vmatpush1.msra.mxu0 0.0
    %231 = vmatprep.subr.mxu0 0.0
    %232 = vmatpush1.msra.mxu0 0.0
    %233 = vmatprep.subr.mxu0 0.0
    %234 = vmatpush1.msra.mxu0 0.0
    %235 = vmatprep.subr.mxu0 0.0
    %236 = vmatpush1.msra.mxu0 0.0
    %237 = vmatprep.subr.mxu0 0.0
    %238 = vmatpush1.msra.mxu0 0.0
    %239 = vmatprep.subr.mxu0 0.0
    %240 = vmatpush1.msra.mxu0 0.0
    %241 = vmatprep.subr.mxu0 0.0
    %242 = vmatpush1.msra.mxu0 0.0
    %243 = vmatprep.subr.mxu0 0.0
    %244 = vmatpush1.msra.mxu0 0.0
    %245 = vmatprep.subr.mxu0 0.0
    %246 = vmatpush1.msra.mxu0 0.0
    %247 = vmatprep.subr.mxu0 0.0
    %248 = vmatpush1.msra.mxu0 0.0
    %249 = vmatprep.subr.mxu0 0.0
    %250 = vmatpush1.msra.mxu0 0.0
    %251 = vmatprep.subr.mxu0 0.0
    %252 = vmatpush1.msra.mxu0 0.0
    %253 = vmatprep.subr.mxu0 0.0
    %254 = vmatpush1.msra.mxu0 0.0
    %255 = vmatprep.subr.mxu0 0.0
    %256 = vmatpush1.msra.mxu0 0.0
    %257 = vmatprep.subr.mxu0 0.0
    %258 = vmatpush1.msra.mxu0 0.0
    %259 = vmatprep.mubr.f32.mxu0 0.0
    %260 = vmatmul.mubr.f32.gmra.mrb[0].mxu0 %v59
    %v261 = vpop.f32.mrb[0].mxu0
    %v262 = vadd.f32 0.0, %v261
    %v263 = vpop.f32.mrb[0].mxu0
    %264 = vmatprep.mubr.f32.mxu0 0.0
    %265 = vmatmul.mubr.f32.gmra.mrb[0].mxu0 %v62
    %v266 = vpop.f32.mrb[0].mxu0
    %v267 = vadd.f32 0.0, %v266
    %v268 = vpop.f32.mrb[0].mxu0
    %269 = vmatprep.mubr.f32.mxu0 0.0
    %270 = vmatmul.mubr.f32.gmra.mrb[0].mxu0 %v65
    %v271 = vpop.f32.mrb[0].mxu0
    %v272 = vadd.f32 0.0, %v271
    %v273 = vpop.f32.mrb[0].mxu0
    %274 = vmatprep.mubr.f32.mxu0 0.0
    %275 = vmatmul.mubr.f32.gmra.mrb[0].mxu0 %v68
    %v276 = vpop.f32.mrb[0].mxu0
    %v277 = vadd.f32 0.0, %v276
    %v278 = vpop.f32.mrb[0].mxu0
    %279 = vmatprep.mubr.f32.mxu0 0.0
    %280 = vmatmul.mubr.f32.gmra.mrb[0].mxu0 %v71
    %v281 = vpop.f32.mrb[0].mxu0
    %v282 = vadd.f32 0.0, %v281
    %v283 = vpop.f32.mrb[0].mxu0
    %284 = vmatprep.mubr.f32.mxu0 0.0
    %285 = vmatmul.mubr.f32.gmra.mrb[0].mxu0 %v74
    %v286 = vpop.f32.mrb[0].mxu0
    %v287 = vadd.f32 0.0, %v286
    %v288 = vpop.f32.mrb[0].mxu0
    %289 = vmatprep.mubr.f32.mxu0 0.0
    %290 = vmatmul.mubr.f32.gmra.mrb[0].mxu0 %v77
    %v291 = vpop.f32.mrb[0].mxu0
    %v292 = vadd.f32 0.0, %v291
    %v293 = vpop.f32.mrb[0].mxu0
    %294 = vmatprep.mubr.f32.mxu0 0.0
    %295 = vmatmul.mubr.f32.gmra.mrb[0].mxu0 %v80
    %v296 = vpop.f32.mrb[0].mxu0
    %v297 = vadd.f32 0.0, %v296
    %v298 = vpop.f32.mrb[0].mxu0
    %299 = vdwg.mxu0
    %300 = vxpose.xlu0.b32.start [1/16] %v262, 128
    %301 = vxpose.xlu0.b32.cont [2/16] %v267, 128
    %302 = vxpose.xlu0.b32.cont [3/16] %v272, 128
    %303 = vxpose.xlu0.b32.cont [4/16] %v277, 128
    %304 = vxpose.xlu0.b32.cont [5/16] %v282, 128
    %305 = vxpose.xlu0.b32.cont [6/16] %v287, 128
    %306 = vxpose.xlu0.b32.cont [7/16] %v292, 128
    %307 = vxpose.xlu0.b32.cont [8/16] %v297, 128
    %308 = vxpose.xlu0.b32.cont [9/16] 0.0, 128
    %309 = vxpose.xlu0.b32.cont [10/16] 0.0, 128
    %310 = vxpose.xlu0.b32.cont [11/16] 0.0, 128
    %311 = vxpose.xlu0.b32.cont [12/16] 0.0, 128
    %312 = vxpose.xlu0.b32.cont [13/16] 0.0, 128
    %313 = vxpose.xlu0.b32.cont [14/16] 0.0, 128
    %314 = vxpose.xlu0.b32.cont [15/16] 0.0, 128
    %315 = vxpose.xlu0.b32.end [16/16] 0.0, 128
    %v316 = vpop.trf.xlu0
    %v317 = vpop.trf.xlu0
    %v318 = vpop.trf.xlu0
    %v319 = vpop.trf.xlu0
    %v320 = vpop.trf.xlu0
    %v321 = vpop.trf.xlu0
    %v322 = vpop.trf.xlu0
    %v323 = vpop.trf.xlu0
    %v324 = vpop.trf.xlu0
    %v325 = vpop.trf.xlu0
    %v326 = vpop.trf.xlu0
    %v327 = vpop.trf.xlu0
    %v328 = vpop.trf.xlu0
    %v329 = vpop.trf.xlu0
    %v330 = vpop.trf.xlu0
    %v331 = vpop.trf.xlu0
    %333 = vset.pattern.permute.xlu0 0
    %334 = vperm.xlu0 %333, %v262
    %v335 = vpop.permute.xlu0 %334
    %338 = vset.pattern.permute.xlu0 0
    %339 = vperm.xlu0 %338, %v267
    %v340 = vpop.permute.xlu0 %339
    %343 = vset.pattern.permute.xlu0 0
    %344 = vperm.xlu0 %343, %v272
    %v345 = vpop.permute.xlu0 %344
    %348 = vset.pattern.permute.xlu0 0
    %349 = vperm.xlu0 %348, %v277
    %v350 = vpop.permute.xlu0 %349
    %353 = vset.pattern.permute.xlu0 0
    %354 = vperm.xlu0 %353, %v282
    %v355 = vpop.permute.xlu0 %354
    %358 = vset.pattern.permute.xlu0 0
    %359 = vperm.xlu0 %358, %v287
    %v360 = vpop.permute.xlu0 %359
    %363 = vset.pattern.permute.xlu0 0
    %364 = vperm.xlu0 %363, %v292
    %v365 = vpop.permute.xlu0 %364
    %368 = vset.pattern.permute.xlu0 0
    %369 = vperm.xlu0 %368, %v297
    %v370 = vpop.permute.xlu0 %369
    %v372 = vlaneseq
    %v373 = vshrl.u32 %v372, 7
    %v374 = vsub.s32 1, %v373
    %v375 = vrot.slane %v316, %v374
    %v376 = vadd.f32 %v335, %v375
    %v377 = vadd.f32 %v340, %v375
    %v378 = vadd.f32 %v345, %v375
    %v379 = vadd.f32 %v350, %v375
    %v380 = vadd.f32 %v355, %v375
    %v381 = vadd.f32 %v360, %v375
    %v382 = vadd.f32 %v365, %v375
    %v383 = vadd.f32 %v370, %v375
    %vm384 = vcmp.gt.f32.partialorder %v376, 0.0
    %vm385 = vcmp.gt.f32.partialorder %v377, 0.0
    %vm386 = vcmp.gt.f32.partialorder %v378, 0.0
    %vm387 = vcmp.gt.f32.partialorder %v379, 0.0
    %vm388 = vcmp.gt.f32.partialorder %v380, 0.0
    %vm389 = vcmp.gt.f32.partialorder %v381, 0.0
    %vm390 = vcmp.gt.f32.partialorder %v382, 0.0
    %vm391 = vcmp.gt.f32.partialorder %v383, 0.0
    %v392 = vmul.f32 %v376, 0.2
    %v393 = vmul.f32 %v377, 0.2
    %v394 = vmul.f32 %v378, 0.2
    %v395 = vmul.f32 %v379, 0.2
    %v396 = vmul.f32 %v380, 0.2
    %v397 = vmul.f32 %v381, 0.2
    %v398 = vmul.f32 %v382, 0.2
    %v399 = vmul.f32 %v383, 0.2
    %v400 = vsel %vm384, %v376, %v392
    %v401 = vsel %vm385, %v377, %v393
    %v402 = vsel %vm386, %v378, %v394
    %v403 = vsel %vm387, %v379, %v395
    %v404 = vsel %vm388, %v380, %v396
    %v405 = vsel %vm389, %v381, %v397
    %v406 = vsel %vm390, %v382, %v398
    %v407 = vsel %vm391, %v383, %v399
    %vm408 = vcmp.gt.f32.partialorder %v37, 0.0
    %vm409 = vcmp.gt.f32.partialorder %v38, 0.0
    %vm410 = vcmp.gt.f32.partialorder %v39, 0.0
    %vm411 = vcmp.gt.f32.partialorder %v40, 0.0
    %vm412 = vcmp.gt.f32.partialorder %v41, 0.0
    %vm413 = vcmp.gt.f32.partialorder %v42, 0.0
    %vm414 = vcmp.gt.f32.partialorder %v43, 0.0
    %vm415 = vcmp.gt.f32.partialorder %v44, 0.0
    %v416 = vsel %vm408, %v400, -1e+30
    %v417 = vsel %vm409, %v401, -1e+30
    %v418 = vsel %vm410, %v402, -1e+30
    %v419 = vsel %vm411, %v403, -1e+30
    %v420 = vsel %vm412, %v404, -1e+30
    %v421 = vsel %vm413, %v405, -1e+30
    %v422 = vsel %vm414, %v406, -1e+30
    %v423 = vsel %vm415, %v407, -1e+30
    %vm424 = vcmask 523264
    %v425 = vsel %vm424, %v416, -inf
    %426 = vmax.xlane.f32.xlu0 %v425
    %v427 = vpop.xlane.xlu0 %426
    %v428 = vsel %vm424, %v417, -inf
    %429 = vmax.xlane.f32.xlu0 %v428
    %v430 = vpop.xlane.xlu0 %429
    %v431 = vsel %vm424, %v418, -inf
    %432 = vmax.xlane.f32.xlu0 %v431
    %v433 = vpop.xlane.xlu0 %432
    %v434 = vsel %vm424, %v419, -inf
    %435 = vmax.xlane.f32.xlu0 %v434
    %v436 = vpop.xlane.xlu0 %435
    %v437 = vsel %vm424, %v420, -inf
    %438 = vmax.xlane.f32.xlu0 %v437
    %v439 = vpop.xlane.xlu0 %438
    %v440 = vsel %vm424, %v421, -inf
    %441 = vmax.xlane.f32.xlu0 %v440
    %v442 = vpop.xlane.xlu0 %441
    %v443 = vsel %vm424, %v422, -inf
    %444 = vmax.xlane.f32.xlu0 %v443
    %v445 = vpop.xlane.xlu0 %444
    %v446 = vsel %vm424, %v423, -inf
    %447 = vmax.xlane.f32.xlu0 %v446
    %v448 = vpop.xlane.xlu0 %447
    %v449 = vsub.f32 %v416, %v427
    %v450 = vsub.f32 %v417, %v430
    %v451 = vsub.f32 %v418, %v433
    %v452 = vsub.f32 %v419, %v436
    %v453 = vsub.f32 %v420, %v439
    %v454 = vsub.f32 %v421, %v442
    %v455 = vsub.f32 %v422, %v445
    %v456 = vsub.f32 %v423, %v448
    %v457 = vmul.f32 %v449, 1.442695
    %v458 = vpow.pop %v457
    %v459 = vmul.f32 %v450, 1.442695
    %v460 = vpow.pop %v459
    %v461 = vmul.f32 %v451, 1.442695
    %v462 = vpow.pop %v461
    %v463 = vmul.f32 %v452, 1.442695
    %v464 = vpow.pop %v463
    %v465 = vmul.f32 %v453, 1.442695
    %v466 = vpow.pop %v465
    %v467 = vmul.f32 %v454, 1.442695
    %v468 = vpow.pop %v467
    %v469 = vmul.f32 %v455, 1.442695
    %v470 = vpow.pop %v469
    %v471 = vmul.f32 %v456, 1.442695
    %v472 = vpow.pop %v471
    %v473 = vsel %vm424, %v458, 0.0
    %474 = vadd.xlane.f32.xlu0 %v473
    %v475 = vpop.xlane.xlu0 %474
    %v476 = vsel %vm424, %v460, 0.0
    %477 = vadd.xlane.f32.xlu0 %v476
    %v478 = vpop.xlane.xlu0 %477
    %v479 = vsel %vm424, %v462, 0.0
    %480 = vadd.xlane.f32.xlu0 %v479
    %v481 = vpop.xlane.xlu0 %480
    %v482 = vsel %vm424, %v464, 0.0
    %483 = vadd.xlane.f32.xlu0 %v482
    %v484 = vpop.xlane.xlu0 %483
    %v485 = vsel %vm424, %v466, 0.0
    %486 = vadd.xlane.f32.xlu0 %v485
    %v487 = vpop.xlane.xlu0 %486
    %v488 = vsel %vm424, %v468, 0.0
    %489 = vadd.xlane.f32.xlu0 %v488
    %v490 = vpop.xlane.xlu0 %489
    %v491 = vsel %vm424, %v470, 0.0
    %492 = vadd.xlane.f32.xlu0 %v491
    %v493 = vpop.xlane.xlu0 %492
    %v494 = vsel %vm424, %v472, 0.0
    %495 = vadd.xlane.f32.xlu0 %v494
    %v496 = vpop.xlane.xlu0 %495
    %v497 = vrcp.pop %v475
    %v498 = vrcp.pop %v478
    %v499 = vrcp.pop %v481
    %v500 = vrcp.pop %v484
    %v501 = vrcp.pop %v487
    %v502 = vrcp.pop %v490
    %v503 = vrcp.pop %v493
    %v504 = vrcp.pop %v496
    %v505 = vmul.f32 %v458, %v497
    %v506 = vmul.f32 %v460, %v498
    %v507 = vmul.f32 %v462, %v499
    %v508 = vmul.f32 %v464, %v500
    %v509 = vmul.f32 %v466, %v501
    %v510 = vmul.f32 %v468, %v502
    %v511 = vmul.f32 %v470, %v503
    %v512 = vmul.f32 %v472, %v504
    %v514 = vsel %vm424, %v505, 0
    %v517 = vsel %vm424, %v506, 0
    %v520 = vsel %vm424, %v507, 0
    %v523 = vsel %vm424, %v508, 0
    %v526 = vsel %vm424, %v509, 0
    %v529 = vsel %vm424, %v510, 0
    %v532 = vsel %vm424, %v511, 0
    %v535 = vsel %vm424, %v512, 0
    %537 = vmatprep.subr.mxu0 0.0
    %538 = vmatpush1.msra.mxu0 %v149
    %539 = vmatprep.subr.mxu0 0.0
    %540 = vmatpush1.msra.mxu0 %v155
    %541 = vmatprep.subr.mxu0 0.0
    %542 = vmatpush1.msra.mxu0 %v161
    %543 = vmatprep.subr.mxu0 0.0
    %544 = vmatpush1.msra.mxu0 %v167
    %545 = vmatprep.subr.mxu0 0.0
    %546 = vmatpush1.msra.mxu0 %v173
    %547 = vmatprep.subr.mxu0 0.0
    %548 = vmatpush1.msra.mxu0 %v179
    %549 = vmatprep.subr.mxu0 0.0
    %550 = vmatpush1.msra.mxu0 %v185
    %551 = vmatprep.subr.mxu0 0.0
    %552 = vmatpush1.msra.mxu0 %v191
    %553 = vmatprep.subr.mxu0 0.0
    %554 = vmatpush1.msra.mxu0 0.0
    %555 = vmatprep.subr.mxu0 0.0
    %556 = vmatpush1.msra.mxu0 0.0
    %557 = vmatprep.subr.mxu0 0.0
    %558 = vmatpush1.msra.mxu0 0.0
    %559 = vmatprep.subr.mxu0 0.0
    %560 = vmatpush1.msra.mxu0 0.0
    %561 = vmatprep.subr.mxu0 0.0
    %562 = vmatpush1.msra.mxu0 0.0
    %563 = vmatprep.subr.mxu0 0.0
    %564 = vmatpush1.msra.mxu0 0.0
    %565 = vmatprep.subr.mxu0 0.0
    %566 = vmatpush1.msra.mxu0 0.0
    %567 = vmatprep.subr.mxu0 0.0
    %568 = vmatpush1.msra.mxu0 0.0
    %569 = vmatprep.subr.mxu0 0.0
    %570 = vmatpush1.msra.mxu0 0.0
    %571 = vmatprep.subr.mxu0 0.0
    %572 = vmatpush1.msra.mxu0 0.0
    %573 = vmatprep.subr.mxu0 0.0
    %574 = vmatpush1.msra.mxu0 0.0
    %575 = vmatprep.subr.mxu0 0.0
    %576 = vmatpush1.msra.mxu0 0.0
    %577 = vmatprep.subr.mxu0 0.0
    %578 = vmatpush1.msra.mxu0 0.0
    %579 = vmatprep.subr.mxu0 0.0
    %580 = vmatpush1.msra.mxu0 0.0
    %581 = vmatprep.subr.mxu0 0.0
    %582 = vmatpush1.msra.mxu0 0.0
    %583 = vmatprep.subr.mxu0 0.0
    %584 = vmatpush1.msra.mxu0 0.0
    %585 = vmatprep.subr.mxu0 0.0
    %586 = vmatpush1.msra.mxu0 0.0
    %587 = vmatprep.subr.mxu0 0.0
    %588 = vmatpush1.msra.mxu0 0.0
    %589 = vmatprep.subr.mxu0 0.0
    %590 = vmatpush1.msra.mxu0 0.0
    %591 = vmatprep.subr.mxu0 0.0
    %592 = vmatpush1.msra.mxu0 0.0
    %593 = vmatprep.subr.mxu0 0.0
    %594 = vmatpush1.msra.mxu0 0.0
    %595 = vmatprep.subr.mxu0 0.0
    %596 = vmatpush1.msra.mxu0 0.0
    %597 = vmatprep.subr.mxu0 0.0
    %598 = vmatpush1.msra.mxu0 0.0
    %599 = vmatprep.subr.mxu0 0.0
    %600 = vmatpush1.msra.mxu0 0.0
    %601 = vmatprep.mubr.f32.mxu0 0.0
    %602 = vmatmul.mubr.f32.gmra.mrb[0].mxu0 %v514
    %v603 = vpop.f32.mrb[0].mxu0
    %v604 = vadd.f32 0.0, %v603
    %v605 = vpop.f32.mrb[0].mxu0
    %606 = vmatprep.mubr.f32.mxu0 0.0
    %607 = vmatmul.mubr.f32.gmra.mrb[0].mxu0 %v517
    %v608 = vpop.f32.mrb[0].mxu0
    %v609 = vadd.f32 0.0, %v608
    %v610 = vpop.f32.mrb[0].mxu0
    %611 = vmatprep.mubr.f32.mxu0 0.0
    %612 = vmatmul.mubr.f32.gmra.mrb[0].mxu0 %v520
    %v613 = vpop.f32.mrb[0].mxu0
    %v614 = vadd.f32 0.0, %v613
    %v615 = vpop.f32.mrb[0].mxu0
    %616 = vmatprep.mubr.f32.mxu0 0.0
    %617 = vmatmul.mubr.f32.gmra.mrb[0].mxu0 %v523
    %v618 = vpop.f32.mrb[0].mxu0
    %v619 = vadd.f32 0.0, %v618
    %v620 = vpop.f32.mrb[0].mxu0
    %621 = vmatprep.mubr.f32.mxu0 0.0
    %622 = vmatmul.mubr.f32.gmra.mrb[0].mxu0 %v526
    %v623 = vpop.f32.mrb[0].mxu0
    %v624 = vadd.f32 0.0, %v623
    %v625 = vpop.f32.mrb[0].mxu0
    %626 = vmatprep.mubr.f32.mxu0 0.0
    %627 = vmatmul.mubr.f32.gmra.mrb[0].mxu0 %v529
    %v628 = vpop.f32.mrb[0].mxu0
    %v629 = vadd.f32 0.0, %v628
    %v630 = vpop.f32.mrb[0].mxu0
    %631 = vmatprep.mubr.f32.mxu0 0.0
    %632 = vmatmul.mubr.f32.gmra.mrb[0].mxu0 %v532
    %v633 = vpop.f32.mrb[0].mxu0
    %v634 = vadd.f32 0.0, %v633
    %v635 = vpop.f32.mrb[0].mxu0
    %636 = vmatprep.mubr.f32.mxu0 0.0
    %637 = vmatmul.mubr.f32.gmra.mrb[0].mxu0 %v535
    %v638 = vpop.f32.mrb[0].mxu0
    %v639 = vadd.f32 0.0, %v638
    %v640 = vpop.f32.mrb[0].mxu0
    %641 = vdwg.mxu0
    %vm642 = vcmp.gt.f32.partialorder %v604, 0.0
    %vm643 = vcmp.gt.f32.partialorder %v609, 0.0
    %vm644 = vcmp.gt.f32.partialorder %v614, 0.0
    %vm645 = vcmp.gt.f32.partialorder %v619, 0.0
    %vm646 = vcmp.gt.f32.partialorder %v624, 0.0
    %vm647 = vcmp.gt.f32.partialorder %v629, 0.0
    %vm648 = vcmp.gt.f32.partialorder %v634, 0.0
    %vm649 = vcmp.gt.f32.partialorder %v639, 0.0
    %v650 = vmin.f32 %v604, 0.0
    %v651 = vmin.f32 %v609, 0.0
    %v652 = vmin.f32 %v614, 0.0
    %v653 = vmin.f32 %v619, 0.0
    %v654 = vmin.f32 %v624, 0.0
    %v655 = vmin.f32 %v629, 0.0
    %v656 = vmin.f32 %v634, 0.0
    %v657 = vmin.f32 %v639, 0.0
    %v658 = vmul.f32 %v650, 1.442695
    %v659 = vpow.pop %v658
    %v660 = vmul.f32 %v651, 1.442695
    %v661 = vpow.pop %v660
    %v662 = vmul.f32 %v652, 1.442695
    %v663 = vpow.pop %v662
    %v664 = vmul.f32 %v653, 1.442695
    %v665 = vpow.pop %v664
    %v666 = vmul.f32 %v654, 1.442695
    %v667 = vpow.pop %v666
    %v668 = vmul.f32 %v655, 1.442695
    %v669 = vpow.pop %v668
    %v670 = vmul.f32 %v656, 1.442695
    %v671 = vpow.pop %v670
    %v672 = vmul.f32 %v657, 1.442695
    %v673 = vpow.pop %v672
    %v674 = vsub.f32 %v659, 1.0
    %v675 = vsub.f32 %v661, 1.0
    %v676 = vsub.f32 %v663, 1.0
    %v677 = vsub.f32 %v665, 1.0
    %v678 = vsub.f32 %v667, 1.0
    %v679 = vsub.f32 %v669, 1.0
    %v680 = vsub.f32 %v671, 1.0
    %v681 = vsub.f32 %v673, 1.0
    %v682 = vsel %vm642, %v604, %v674
    %v683 = vsel %vm643, %v609, %v675
    %v684 = vsel %vm644, %v614, %v676
    %v685 = vsel %vm645, %v619, %v677
    %v686 = vsel %vm646, %v624, %v678
    %v687 = vsel %vm647, %v629, %v679
    %v688 = vsel %vm648, %v634, %v680
    %v689 = vsel %vm649, %v639, %v681
    %v690 = vmul.f32 %v682, %v682
    %v691 = vmul.f32 %v683, %v683
    %v692 = vmul.f32 %v684, %v684
    %v693 = vmul.f32 %v685, %v685
    %v694 = vmul.f32 %v686, %v686
    %v695 = vmul.f32 %v687, %v687
    %v696 = vmul.f32 %v688, %v688
    %v697 = vmul.f32 %v689, %v689
    %698 = vadd.xlane.f32.xlu0 %v690
    %v699 = vpop.xlane.xlu0 %698
    %700 = vadd.xlane.f32.xlu0 %v691
    %v701 = vpop.xlane.xlu0 %700
    %702 = vadd.xlane.f32.xlu0 %v692
    %v703 = vpop.xlane.xlu0 %702
    %704 = vadd.xlane.f32.xlu0 %v693
    %v705 = vpop.xlane.xlu0 %704
    %706 = vadd.xlane.f32.xlu0 %v694
    %v707 = vpop.xlane.xlu0 %706
    %708 = vadd.xlane.f32.xlu0 %v695
    %v709 = vpop.xlane.xlu0 %708
    %710 = vadd.xlane.f32.xlu0 %v696
    %v711 = vpop.xlane.xlu0 %710
    %712 = vadd.xlane.f32.xlu0 %v697
    %v713 = vpop.xlane.xlu0 %712
    %714 = vset.pattern.permute.xlu0 2
    %715 = vperm.xlu0 %714, %v262
    %v716 = vpop.permute.xlu0 %715
    %718 = vset.pattern.permute.xlu0 2
    %719 = vperm.xlu0 %718, %v267
    %v720 = vpop.permute.xlu0 %719
    %722 = vset.pattern.permute.xlu0 2
    %723 = vperm.xlu0 %722, %v272
    %v724 = vpop.permute.xlu0 %723
    %726 = vset.pattern.permute.xlu0 2
    %727 = vperm.xlu0 %726, %v277
    %v728 = vpop.permute.xlu0 %727
    %730 = vset.pattern.permute.xlu0 2
    %731 = vperm.xlu0 %730, %v282
    %v732 = vpop.permute.xlu0 %731
    %734 = vset.pattern.permute.xlu0 2
    %735 = vperm.xlu0 %734, %v287
    %v736 = vpop.permute.xlu0 %735
    %738 = vset.pattern.permute.xlu0 2
    %739 = vperm.xlu0 %738, %v292
    %v740 = vpop.permute.xlu0 %739
    %742 = vset.pattern.permute.xlu0 2
    %743 = vperm.xlu0 %742, %v297
    %v744 = vpop.permute.xlu0 %743
    %v746 = vlaneseq
    %v747 = vshrl.u32 %v746, 7
    %v748 = vsub.s32 3, %v747
    %v749 = vrot.slane %v316, %v748
    %v750 = vadd.f32 %v716, %v749
    %v751 = vadd.f32 %v720, %v749
    %v752 = vadd.f32 %v724, %v749
    %v753 = vadd.f32 %v728, %v749
    %v754 = vadd.f32 %v732, %v749
    %v755 = vadd.f32 %v736, %v749
    %v756 = vadd.f32 %v740, %v749
    %v757 = vadd.f32 %v744, %v749
    %vm758 = vcmp.gt.f32.partialorder %v750, 0.0
    %vm759 = vcmp.gt.f32.partialorder %v751, 0.0
    %vm760 = vcmp.gt.f32.partialorder %v752, 0.0
    %vm761 = vcmp.gt.f32.partialorder %v753, 0.0
    %vm762 = vcmp.gt.f32.partialorder %v754, 0.0
    %vm763 = vcmp.gt.f32.partialorder %v755, 0.0
    %vm764 = vcmp.gt.f32.partialorder %v756, 0.0
    %vm765 = vcmp.gt.f32.partialorder %v757, 0.0
    %v766 = vmul.f32 %v750, 0.2
    %v767 = vmul.f32 %v751, 0.2
    %v768 = vmul.f32 %v752, 0.2
    %v769 = vmul.f32 %v753, 0.2
    %v770 = vmul.f32 %v754, 0.2
    %v771 = vmul.f32 %v755, 0.2
    %v772 = vmul.f32 %v756, 0.2
    %v773 = vmul.f32 %v757, 0.2
    %v774 = vsel %vm758, %v750, %v766
    %v775 = vsel %vm759, %v751, %v767
    %v776 = vsel %vm760, %v752, %v768
    %v777 = vsel %vm761, %v753, %v769
    %v778 = vsel %vm762, %v754, %v770
    %v779 = vsel %vm763, %v755, %v771
    %v780 = vsel %vm764, %v756, %v772
    %v781 = vsel %vm765, %v757, %v773
    %v782 = vsel %vm408, %v774, -1e+30
    %v783 = vsel %vm409, %v775, -1e+30
    %v784 = vsel %vm410, %v776, -1e+30
    %v785 = vsel %vm411, %v777, -1e+30
    %v786 = vsel %vm412, %v778, -1e+30
    %v787 = vsel %vm413, %v779, -1e+30
    %v788 = vsel %vm414, %v780, -1e+30
    %v789 = vsel %vm415, %v781, -1e+30
    %v790 = vsel %vm424, %v782, -inf
    %791 = vmax.xlane.f32.xlu0 %v790
    %v792 = vpop.xlane.xlu0 %791
    %v793 = vsel %vm424, %v783, -inf
    %794 = vmax.xlane.f32.xlu0 %v793
    %v795 = vpop.xlane.xlu0 %794
    %v796 = vsel %vm424, %v784, -inf
    %797 = vmax.xlane.f32.xlu0 %v796
    %v798 = vpop.xlane.xlu0 %797
    %v799 = vsel %vm424, %v785, -inf
    %800 = vmax.xlane.f32.xlu0 %v799
    %v801 = vpop.xlane.xlu0 %800
    %v802 = vsel %vm424, %v786, -inf
    %803 = vmax.xlane.f32.xlu0 %v802
    %v804 = vpop.xlane.xlu0 %803
    %v805 = vsel %vm424, %v787, -inf
    %806 = vmax.xlane.f32.xlu0 %v805
    %v807 = vpop.xlane.xlu0 %806
    %v808 = vsel %vm424, %v788, -inf
    %809 = vmax.xlane.f32.xlu0 %v808
    %v810 = vpop.xlane.xlu0 %809
    %v811 = vsel %vm424, %v789, -inf
    %812 = vmax.xlane.f32.xlu0 %v811
    %v813 = vpop.xlane.xlu0 %812
    %v814 = vsub.f32 %v782, %v792
    %v815 = vsub.f32 %v783, %v795
    %v816 = vsub.f32 %v784, %v798
    %v817 = vsub.f32 %v785, %v801
    %v818 = vsub.f32 %v786, %v804
    %v819 = vsub.f32 %v787, %v807
    %v820 = vsub.f32 %v788, %v810
    %v821 = vsub.f32 %v789, %v813
    %v822 = vmul.f32 %v814, 1.442695
    %v823 = vpow.pop %v822
    %v824 = vmul.f32 %v815, 1.442695
    %v825 = vpow.pop %v824
    %v826 = vmul.f32 %v816, 1.442695
    %v827 = vpow.pop %v826
    %v828 = vmul.f32 %v817, 1.442695
    %v829 = vpow.pop %v828
    %v830 = vmul.f32 %v818, 1.442695
    %v831 = vpow.pop %v830
    %v832 = vmul.f32 %v819, 1.442695
    %v833 = vpow.pop %v832
    %v834 = vmul.f32 %v820, 1.442695
    %v835 = vpow.pop %v834
    %v836 = vmul.f32 %v821, 1.442695
    %v837 = vpow.pop %v836
    %v838 = vsel %vm424, %v823, 0.0
    %839 = vadd.xlane.f32.xlu0 %v838
    %v840 = vpop.xlane.xlu0 %839
    %v841 = vsel %vm424, %v825, 0.0
    %842 = vadd.xlane.f32.xlu0 %v841
    %v843 = vpop.xlane.xlu0 %842
    %v844 = vsel %vm424, %v827, 0.0
    %845 = vadd.xlane.f32.xlu0 %v844
    %v846 = vpop.xlane.xlu0 %845
    %v847 = vsel %vm424, %v829, 0.0
    %848 = vadd.xlane.f32.xlu0 %v847
    %v849 = vpop.xlane.xlu0 %848
    %v850 = vsel %vm424, %v831, 0.0
    %851 = vadd.xlane.f32.xlu0 %v850
    %v852 = vpop.xlane.xlu0 %851
    %v853 = vsel %vm424, %v833, 0.0
    %854 = vadd.xlane.f32.xlu0 %v853
    %v855 = vpop.xlane.xlu0 %854
    %v856 = vsel %vm424, %v835, 0.0
    %857 = vadd.xlane.f32.xlu0 %v856
    %v858 = vpop.xlane.xlu0 %857
    %v859 = vsel %vm424, %v837, 0.0
    %860 = vadd.xlane.f32.xlu0 %v859
    %v861 = vpop.xlane.xlu0 %860
    %v862 = vrcp.pop %v840
    %v863 = vrcp.pop %v843
    %v864 = vrcp.pop %v846
    %v865 = vrcp.pop %v849
    %v866 = vrcp.pop %v852
    %v867 = vrcp.pop %v855
    %v868 = vrcp.pop %v858
    %v869 = vrcp.pop %v861
    %v870 = vmul.f32 %v823, %v862
    %v871 = vmul.f32 %v825, %v863
    %v872 = vmul.f32 %v827, %v864
    %v873 = vmul.f32 %v829, %v865
    %v874 = vmul.f32 %v831, %v866
    %v875 = vmul.f32 %v833, %v867
    %v876 = vmul.f32 %v835, %v868
    %v877 = vmul.f32 %v837, %v869
    %v879 = vsel %vm424, %v870, 0
    %v882 = vsel %vm424, %v871, 0
    %v885 = vsel %vm424, %v872, 0
    %v888 = vsel %vm424, %v873, 0
    %v891 = vsel %vm424, %v874, 0
    %v894 = vsel %vm424, %v875, 0
    %v897 = vsel %vm424, %v876, 0
    %v900 = vsel %vm424, %v877, 0
    %902 = vmatprep.subr.mxu0 0.0
    %903 = vmatpush1.msra.mxu0 %v151
    %904 = vmatprep.subr.mxu0 0.0
    %905 = vmatpush1.msra.mxu0 %v157
    %906 = vmatprep.subr.mxu0 0.0
    %907 = vmatpush1.msra.mxu0 %v163
    %908 = vmatprep.subr.mxu0 0.0
    %909 = vmatpush1.msra.mxu0 %v169
    %910 = vmatprep.subr.mxu0 0.0
    %911 = vmatpush1.msra.mxu0 %v175
    %912 = vmatprep.subr.mxu0 0.0
    %913 = vmatpush1.msra.mxu0 %v181
    %914 = vmatprep.subr.mxu0 0.0
    %915 = vmatpush1.msra.mxu0 %v187
    %916 = vmatprep.subr.mxu0 0.0
    %917 = vmatpush1.msra.mxu0 %v193
    %918 = vmatprep.subr.mxu0 0.0
    %919 = vmatpush1.msra.mxu0 0.0
    %920 = vmatprep.subr.mxu0 0.0
    %921 = vmatpush1.msra.mxu0 0.0
    %922 = vmatprep.subr.mxu0 0.0
    %923 = vmatpush1.msra.mxu0 0.0
    %924 = vmatprep.subr.mxu0 0.0
    %925 = vmatpush1.msra.mxu0 0.0
    %926 = vmatprep.subr.mxu0 0.0
    %927 = vmatpush1.msra.mxu0 0.0
    %928 = vmatprep.subr.mxu0 0.0
    %929 = vmatpush1.msra.mxu0 0.0
    %930 = vmatprep.subr.mxu0 0.0
    %931 = vmatpush1.msra.mxu0 0.0
    %932 = vmatprep.subr.mxu0 0.0
    %933 = vmatpush1.msra.mxu0 0.0
    %934 = vmatprep.subr.mxu0 0.0
    %935 = vmatpush1.msra.mxu0 0.0
    %936 = vmatprep.subr.mxu0 0.0
    %937 = vmatpush1.msra.mxu0 0.0
    %938 = vmatprep.subr.mxu0 0.0
    %939 = vmatpush1.msra.mxu0 0.0
    %940 = vmatprep.subr.mxu0 0.0
    %941 = vmatpush1.msra.mxu0 0.0
    %942 = vmatprep.subr.mxu0 0.0
    %943 = vmatpush1.msra.mxu0 0.0
    %944 = vmatprep.subr.mxu0 0.0
    %945 = vmatpush1.msra.mxu0 0.0
    %946 = vmatprep.subr.mxu0 0.0
    %947 = vmatpush1.msra.mxu0 0.0
    %948 = vmatprep.subr.mxu0 0.0
    %949 = vmatpush1.msra.mxu0 0.0
    %950 = vmatprep.subr.mxu0 0.0
    %951 = vmatpush1.msra.mxu0 0.0
    %952 = vmatprep.subr.mxu0 0.0
    %953 = vmatpush1.msra.mxu0 0.0
    %954 = vmatprep.subr.mxu0 0.0
    %955 = vmatpush1.msra.mxu0 0.0
    %956 = vmatprep.subr.mxu0 0.0
    %957 = vmatpush1.msra.mxu0 0.0
    %958 = vmatprep.subr.mxu0 0.0
    %959 = vmatpush1.msra.mxu0 0.0
    %960 = vmatprep.subr.mxu0 0.0
    %961 = vmatpush1.msra.mxu0 0.0
    %962 = vmatprep.subr.mxu0 0.0
    %963 = vmatpush1.msra.mxu0 0.0
    %964 = vmatprep.subr.mxu0 0.0
    %965 = vmatpush1.msra.mxu0 0.0
    %966 = vmatprep.mubr.f32.mxu0 0.0
    %967 = vmatmul.mubr.f32.gmra.mrb[0].mxu0 %v879
    %v968 = vpop.f32.mrb[0].mxu0
    %v969 = vadd.f32 0.0, %v968
    %v970 = vpop.f32.mrb[0].mxu0
    %971 = vmatprep.mubr.f32.mxu0 0.0
    %972 = vmatmul.mubr.f32.gmra.mrb[0].mxu0 %v882
    %v973 = vpop.f32.mrb[0].mxu0
    %v974 = vadd.f32 0.0, %v973
    %v975 = vpop.f32.mrb[0].mxu0
    %976 = vmatprep.mubr.f32.mxu0 0.0
    %977 = vmatmul.mubr.f32.gmra.mrb[0].mxu0 %v885
    %v978 = vpop.f32.mrb[0].mxu0
    %v979 = vadd.f32 0.0, %v978
    %v980 = vpop.f32.mrb[0].mxu0
    %981 = vmatprep.mubr.f32.mxu0 0.0
    %982 = vmatmul.mubr.f32.gmra.mrb[0].mxu0 %v888
    %v983 = vpop.f32.mrb[0].mxu0
    %v984 = vadd.f32 0.0, %v983
    %v985 = vpop.f32.mrb[0].mxu0
    %986 = vmatprep.mubr.f32.mxu0 0.0
    %987 = vmatmul.mubr.f32.gmra.mrb[0].mxu0 %v891
    %v988 = vpop.f32.mrb[0].mxu0
    %v989 = vadd.f32 0.0, %v988
    %v990 = vpop.f32.mrb[0].mxu0
    %991 = vmatprep.mubr.f32.mxu0 0.0
    %992 = vmatmul.mubr.f32.gmra.mrb[0].mxu0 %v894
    %v993 = vpop.f32.mrb[0].mxu0
    %v994 = vadd.f32 0.0, %v993
    %v995 = vpop.f32.mrb[0].mxu0
    %996 = vmatprep.mubr.f32.mxu0 0.0
    %997 = vmatmul.mubr.f32.gmra.mrb[0].mxu0 %v897
    %v998 = vpop.f32.mrb[0].mxu0
    %v999 = vadd.f32 0.0, %v998
    %v1000 = vpop.f32.mrb[0].mxu0
    %1001 = vmatprep.mubr.f32.mxu0 0.0
    %1002 = vmatmul.mubr.f32.gmra.mrb[0].mxu0 %v900
    %v1003 = vpop.f32.mrb[0].mxu0
    %v1004 = vadd.f32 0.0, %v1003
    %v1005 = vpop.f32.mrb[0].mxu0
    %1006 = vdwg.mxu0
    %vm1007 = vcmp.gt.f32.partialorder %v969, 0.0
    %vm1008 = vcmp.gt.f32.partialorder %v974, 0.0
    %vm1009 = vcmp.gt.f32.partialorder %v979, 0.0
    %vm1010 = vcmp.gt.f32.partialorder %v984, 0.0
    %vm1011 = vcmp.gt.f32.partialorder %v989, 0.0
    %vm1012 = vcmp.gt.f32.partialorder %v994, 0.0
    %vm1013 = vcmp.gt.f32.partialorder %v999, 0.0
    %vm1014 = vcmp.gt.f32.partialorder %v1004, 0.0
    %v1015 = vmin.f32 %v969, 0.0
    %v1016 = vmin.f32 %v974, 0.0
    %v1017 = vmin.f32 %v979, 0.0
    %v1018 = vmin.f32 %v984, 0.0
    %v1019 = vmin.f32 %v989, 0.0
    %v1020 = vmin.f32 %v994, 0.0
    %v1021 = vmin.f32 %v999, 0.0
    %v1022 = vmin.f32 %v1004, 0.0
    %v1023 = vmul.f32 %v1015, 1.442695
    %v1024 = vpow.pop %v1023
    %v1025 = vmul.f32 %v1016, 1.442695
    %v1026 = vpow.pop %v1025
    %v1027 = vmul.f32 %v1017, 1.442695
    %v1028 = vpow.pop %v1027
    %v1029 = vmul.f32 %v1018, 1.442695
    %v1030 = vpow.pop %v1029
    %v1031 = vmul.f32 %v1019, 1.442695
    %v1032 = vpow.pop %v1031
    %v1033 = vmul.f32 %v1020, 1.442695
    %v1034 = vpow.pop %v1033
    %v1035 = vmul.f32 %v1021, 1.442695
    %v1036 = vpow.pop %v1035
    %v1037 = vmul.f32 %v1022, 1.442695
    %v1038 = vpow.pop %v1037
    %v1039 = vsub.f32 %v1024, 1.0
    %v1040 = vsub.f32 %v1026, 1.0
    %v1041 = vsub.f32 %v1028, 1.0
    %v1042 = vsub.f32 %v1030, 1.0
    %v1043 = vsub.f32 %v1032, 1.0
    %v1044 = vsub.f32 %v1034, 1.0
    %v1045 = vsub.f32 %v1036, 1.0
    %v1046 = vsub.f32 %v1038, 1.0
    %v1047 = vsel %vm1007, %v969, %v1039
    %v1048 = vsel %vm1008, %v974, %v1040
    %v1049 = vsel %vm1009, %v979, %v1041
    %v1050 = vsel %vm1010, %v984, %v1042
    %v1051 = vsel %vm1011, %v989, %v1043
    %v1052 = vsel %vm1012, %v994, %v1044
    %v1053 = vsel %vm1013, %v999, %v1045
    %v1054 = vsel %vm1014, %v1004, %v1046
    %v1055 = vmul.f32 %v1047, %v1047
    %v1056 = vmul.f32 %v1048, %v1048
    %v1057 = vmul.f32 %v1049, %v1049
    %v1058 = vmul.f32 %v1050, %v1050
    %v1059 = vmul.f32 %v1051, %v1051
    %v1060 = vmul.f32 %v1052, %v1052
    %v1061 = vmul.f32 %v1053, %v1053
    %v1062 = vmul.f32 %v1054, %v1054
    %1063 = vadd.xlane.f32.xlu0 %v1055
    %v1064 = vpop.xlane.xlu0 %1063
    %1065 = vadd.xlane.f32.xlu0 %v1056
    %v1066 = vpop.xlane.xlu0 %1065
    %1067 = vadd.xlane.f32.xlu0 %v1057
    %v1068 = vpop.xlane.xlu0 %1067
    %1069 = vadd.xlane.f32.xlu0 %v1058
    %v1070 = vpop.xlane.xlu0 %1069
    %1071 = vadd.xlane.f32.xlu0 %v1059
    %v1072 = vpop.xlane.xlu0 %1071
    %1073 = vadd.xlane.f32.xlu0 %v1060
    %v1074 = vpop.xlane.xlu0 %1073
    %1075 = vadd.xlane.f32.xlu0 %v1061
    %v1076 = vpop.xlane.xlu0 %1075
    %1077 = vadd.xlane.f32.xlu0 %v1062
    %v1078 = vpop.xlane.xlu0 %1077
    %v1079 = vadd.f32 %v699, %v1064
    %v1080 = vadd.f32 %v701, %v1066
    %v1081 = vadd.f32 %v703, %v1068
    %v1082 = vadd.f32 %v705, %v1070
    %v1083 = vadd.f32 %v707, %v1072
    %v1084 = vadd.f32 %v709, %v1074
    %v1085 = vadd.f32 %v711, %v1076
    %v1086 = vadd.f32 %v713, %v1078
    %v1087 = vmax.f32 %v1079, 1e-24
    %v1088 = vmax.f32 %v1080, 1e-24
    %v1089 = vmax.f32 %v1081, 1e-24
    %v1090 = vmax.f32 %v1082, 1e-24
    %v1091 = vmax.f32 %v1083, 1e-24
    %v1092 = vmax.f32 %v1084, 1e-24
    %v1093 = vmax.f32 %v1085, 1e-24
    %v1094 = vmax.f32 %v1086, 1e-24
    %v1095 = vrsqrt.pop %v1087
    %v1096 = vrsqrt.pop %v1088
    %v1097 = vrsqrt.pop %v1089
    %v1098 = vrsqrt.pop %v1090
    %v1099 = vrsqrt.pop %v1091
    %v1100 = vrsqrt.pop %v1092
    %v1101 = vrsqrt.pop %v1093
    %v1102 = vrsqrt.pop %v1094
    %v1103 = vmul.f32 %v682, %v1095
    %v1104 = vmul.f32 %v683, %v1096
    %v1105 = vmul.f32 %v684, %v1097
    %v1106 = vmul.f32 %v685, %v1098
    %v1107 = vmul.f32 %v686, %v1099
    %v1108 = vmul.f32 %v687, %v1100
    %v1109 = vmul.f32 %v688, %v1101
    %v1110 = vmul.f32 %v689, %v1102
    %1111 = vst [vmem:[#allocation5] sm:$0xff] %v1103
    %1112 = vst [vmem:[#allocation5 + $0x10] sm:$0xff] %v1104
    %1113 = vst [vmem:[#allocation5 + $0x20] sm:$0xff] %v1105
    %1114 = vst [vmem:[#allocation5 + $0x30] sm:$0xff] %v1106
    %1115 = vst [vmem:[#allocation5 + $0x40] sm:$0xff] %v1107
    %1116 = vst [vmem:[#allocation5 + $0x50] sm:$0xff] %v1108
    %1117 = vst [vmem:[#allocation5 + $0x60] sm:$0xff] %v1109
    %1118 = vst [vmem:[#allocation5 + $0x70] sm:$0xff] %v1110
    %v1119 = vmul.f32 %v1047, %v1095
    %v1120 = vmul.f32 %v1048, %v1096
    %v1121 = vmul.f32 %v1049, %v1097
    %v1122 = vmul.f32 %v1050, %v1098
    %v1123 = vmul.f32 %v1051, %v1099
    %v1124 = vmul.f32 %v1052, %v1100
    %v1125 = vmul.f32 %v1053, %v1101
    %v1126 = vmul.f32 %v1054, %v1102
    %1127 = vst [vmem:[#allocation5 + $0x8] sm:$0xff] %v1119
    %1128 = vst [vmem:[#allocation5 + $0x18] sm:$0xff] %v1120
    %1129 = vst [vmem:[#allocation5 + $0x28] sm:$0xff] %v1121
    %1130 = vst [vmem:[#allocation5 + $0x38] sm:$0xff] %v1122
    %1131 = vst [vmem:[#allocation5 + $0x48] sm:$0xff] %v1123
    %1132 = vst [vmem:[#allocation5 + $0x58] sm:$0xff] %v1124
    %1133 = vst [vmem:[#allocation5 + $0x68] sm:$0xff] %v1125
    %1134 = vst [vmem:[#allocation5 + $0x78] sm:$0xff] %v1126
    // Predicated region
    $region18: #{tpu_custom_call.1} parent=1 // pred_check
      _
    $region19: #{tpu_custom_call.1} parent=1 // pred_check_branch
      %1136 = sbr.rel (0) target = $region21
    $region20: #{tpu_custom_call.1} parent=1 // pred_region
      %s1138 = ssub.s32 2048, 2048
      %1139 = vsyncadd [#allocation4], %s1138
      %s1140 = sshll.u32 [#allocation5], 4
      %s1141 = int_to_ptr.vmem [resolvable:$true] %s1140
      %1146 = dma.vmem_to_hbm [thread:$0]  %s1141, 2048, %s3, [#allocation4], 256, 256, 16
    $region21: #{tpu_custom_call.1} parent=1 // pred_fallthru
      _
    // Predicated region
    $region22: #{tpu_custom_call.1} parent=1 // pred_check
      _
    $region23: #{tpu_custom_call.1} parent=1 // pred_check_branch
      %1148 = sbr.rel (0) target = $region25
    $region24: #{tpu_custom_call.1} parent=1 // pred_region
      %1149 = dma.done [#allocation4], 2048
    $region25: #{tpu_custom_call.1} parent=1 // pred_fallthru
      _
    %1150 = vsyncpa [#allocation3], 1
    %1151 = vsyncpa [#allocation4], 1

</llo_original>
